<compile_context>
chip_gen: v7x
topology: tpu7x:2x2x1
jax: 0.10.0
libtpu: 0.0.40
codegen_flags: <defaults>
</compile_context>

<pallas_src>
import jax
import jax.numpy as jnp
from jax.experimental import pallas as pl
from jax.experimental.pallas import tpu as pltpu

# config['model']['loss_weights']
GEN_WEIGHT = 1.0
CLS_WEIGHT = 0.5
IGNORE_INDEX = -100  # PyTorch CrossEntropyLoss default ignore_index (T5 padding)


def _vmem_limit_bytes():
    """Per-generation scoped-VMEM budget with headroom for compiler temps."""
    cap = 64 * 1024 * 1024  # conservative default = v7x (64 MiB / TensorCore)
    try:
        cap = int(getattr(pltpu.get_tpu_info(), "vmem_capacity_bytes", cap))
    except Exception:
        pass
    return max(32 * 1024 * 1024, min(cap * 3 // 4, 100 * 1024 * 1024))


def _pick_tile(dim, preferred, quantum):
    """Largest multiple of `quantum` <= preferred that divides dim, else dim."""
    if dim <= preferred:
        return dim
    t = preferred
    while t >= quantum:
        if dim % t == 0:
            return t
        t -= quantum
    return dim


# --------------------------------------------------------------------------- #
# Generation head: weight-stationary tiled lm-head matmul + per-tile softmax
# statistics.  Grid = (NC, V//TV, R): NC is a leading "parallel" row-chunk axis
# (megacore split on v7x), the vocab axis sits OUTSIDE the row axis so each
# (D, TV) weight tile is fetched once per (chunk, vocab-tile).
# --------------------------------------------------------------------------- #
def _make_gen_kernel(write_logits):
    def kernel(h_ref, w_ref, labels_ref, *out_refs):
        if write_logits:
            logits_ref, m_ref, l_ref, lab_ref = out_refs
        else:
            m_ref, l_ref, lab_ref = out_refs

        tv = w_ref.shape[1]
        # bf16 x bf16 -> f32 accumulation on the MXU.
        logits = jnp.dot(h_ref[...], w_ref[...],
                         preferred_element_type=jnp.float32)      # [TN, TV] f32
        if write_logits:
            # bf16 writeback of the [N, V] logits (largest single HBM stream;
            # skipped entirely on the losses-only path).
            logits_ref[...] = logits.astype(logits_ref.dtype)

        labels = labels_ref[...]                                   # [TN, 1] int32
        # Cheaper label gather: shift the label once per row (TN,1) instead of
        # materializing a per-element vocab-id add over the whole (TN, TV) tile.
        rel = labels - pl.program_id(1) * tv                       # [TN, 1]
        lane = jax.lax.broadcasted_iota(jnp.int32, logits.shape, 1)

        m_tile = jnp.max(logits, axis=-1, keepdims=True)                     # [TN,1]
        l_tile = jnp.sum(jnp.exp(logits - m_tile), axis=-1, keepdims=True)   # [TN,1]
        lab_tile = jnp.sum(jnp.where(lane == rel, logits, 0.0),
                           axis=-1, keepdims=True)                           # [TN,1]

        m_ref[0] = m_tile
        l_ref[0] = l_tile
        lab_ref[0] = lab_tile

    return kernel


# --------------------------------------------------------------------------- #
# Classification head: Linear(D, 2) + 2-class CE on an already mean-pooled
# (B, D) matrix.  Microscopic compute -> one ungridded invocation.
# --------------------------------------------------------------------------- #
def _cls_head_kernel(pooled_ref, w_ref, b_ref, y_ref, logits_ref, loss_ref):
    logits = jnp.dot(pooled_ref[...], w_ref[...],
                     preferred_element_type=jnp.float32) + b_ref[...]  # [B, 2]
    logits_ref[...] = logits

    y = y_ref[...]                                                     # [B, 1]
    m = jnp.max(logits, axis=-1, keepdims=True)
    lse = m + jnp.log(jnp.sum(jnp.exp(logits - m), axis=-1, keepdims=True))
    iota = jax.lax.broadcasted_iota(jnp.int32, logits.shape, 1)
    lab = jnp.sum(jnp.where(iota == y, logits, 0.0), axis=-1, keepdims=True)
    loss_ref[...] = jnp.mean(lse - lab, axis=0, keepdims=True)


def mwr_forward(hidden_states, lm_head_w, labels, cls_w, cls_b, class_labels,
                tile_n=None, tile_v=None, return_logits=True):
    """Pallas wrapper reproducing MWRModel.forward output-dict semantics.

    return_logits=False is a losses-only path that skips the (N, V) bf16 logits
    writeback (the largest HBM stream) for training loops that only need the
    loss.
    """
    B, T, D = hidden_states.shape
    V = lm_head_w.shape[1]
    N = B * T

    # TN quantum = 16 (bf16 sublane packing); TV multiple of 128 lanes.  Keep
    # TN*TV*4 (the live f32 logits tile) modest to bound vreg/VMEM spill.
    TN = tile_n if tile_n is not None else _pick_tile(N, 256, 16)
    TV = tile_v if tile_v is not None else _pick_tile(V, 1024, 128)
    assert N % TN == 0 and V % TV == 0
    row_tiles = N // TN
    Vt = V // TV
    # Leading parallel row-chunk axis: 2 when it divides evenly (megacore on
    # v7x), otherwise 1.  On single-TC chips NC=2 only costs one extra weight
    # pass, still ~row_tiles/2 x less weight traffic than row-stationary order.
    NC = 2 if (row_tiles >= 2 and row_tiles % 2 == 0) else 1
    R = row_tiles // NC

    # Reshapes / casts stay in the wrapper (free layout plumbing); the MXU gets
    # bf16 inputs, accumulation stays f32 inside the kernel.
    h2_bf16 = hidden_states.reshape(N, D).astype(jnp.bfloat16)
    w_bf16 = lm_head_w.astype(jnp.bfloat16)
    labels2 = labels.reshape(N, 1).astype(jnp.int32)

    out_shapes = []
    out_specs = []
    if return_logits:
        # TODO(synk): returned logits are bf16 (PyTorch returns f32 lm-head
        # logits); intentional bandwidth saving, ~1e-2 relative error.
        out_shapes.append(jax.ShapeDtypeStruct((N, V), jnp.bfloat16))
        out_specs.append(pl.BlockSpec((TN, TV), lambda c, v, r: (c * R + r, v)))
    stat_shape = jax.ShapeDtypeStruct((Vt, N, 1), jnp.float32)
    stat_spec = pl.BlockSpec((1, TN, 1), lambda c, v, r: (v, c * R + r, 0))
    out_shapes += [stat_shape, stat_shape, stat_shape]
    out_specs += [stat_spec, stat_spec, stat_spec]

    # Weight-stationary traffic model (kept in sync with the grid order):
    #   activations re-streamed once per vocab tile, weights once per chunk,
    #   optional bf16 logits writeback, tiny stats/labels streams.
    bytes_accessed = (Vt * N * D * 2          # activation re-stream
                      + NC * D * V * 2        # lm-head weights
                      + Vt * N * 4            # labels re-read
                      + 3 * Vt * N * 4)       # softmax stats writeback
    if return_logits:
        bytes_accessed += N * V * 2
    cost = pl.CostEstimate(flops=2 * N * D * V, transcendentals=N * V,
                           bytes_accessed=bytes_accessed)

    outs = pl.pallas_call(
        _make_gen_kernel(return_logits),
        out_shape=tuple(out_shapes),
        grid_spec=pltpu.PrefetchScalarGridSpec(
            num_scalar_prefetch=0,
            grid=(NC, Vt, R),
            in_specs=[
                pl.BlockSpec((TN, D), lambda c, v, r: (c * R + r, 0)),
                pl.BlockSpec((D, TV), lambda c, v, r: (0, v)),   # stationary in r
                pl.BlockSpec((TN, 1), lambda c, v, r: (c * R + r, 0)),
            ],
            out_specs=tuple(out_specs),
        ),
        compiler_params=pltpu.CompilerParams(
            dimension_semantics=("parallel", "arbitrary", "arbitrary"),
            vmem_limit_bytes=_vmem_limit_bytes(),
        ),
        cost_estimate=cost,
    )(h2_bf16, w_bf16, labels2)

    if return_logits:
        gen_logits_flat, m_s, l_s, lab_s = outs
        gen_logits = gen_logits_flat.reshape(B, T, V)
    else:
        gen_logits = None
        m_s, l_s, lab_s = outs

    # Combine per-vocab-tile stats into a stable logsumexp + masked NLL (tiny
    # (Vt, N) arrays -> plain JAX).
    m_all = m_s[:, :, 0]                                  # [Vt, N]
    l_all = l_s[:, :, 0]                                  # [Vt, N]
    lab = jnp.sum(lab_s[:, :, 0], axis=0)                 # [N]
    m_max = jnp.max(m_all, axis=0)                        # [N]
    lse = m_max + jnp.log(jnp.sum(l_all * jnp.exp(m_all - m_max), axis=0))

    labels_flat = labels2[:, 0]
    valid = labels_flat != IGNORE_INDEX
    nll = jnp.where(valid, lse - lab, 0.0)
    denom = jnp.maximum(jnp.sum(valid.astype(jnp.float32)), 1.0)
    gen_loss = jnp.sum(nll) / denom
    # TODO(synk): PyTorch CE returns NaN when every label is ignore_index; here
    # a fully-ignored batch yields 0.0 instead.

    # Classification head: mean-pool hoisted out of the kernel (no untiled
    # [B,T,D] f32 copy into VMEM), only the (B, D) pooled matrix is passed in.
    pooled = jnp.mean(hidden_states.astype(jnp.float32), axis=1)        # [B, D]
    cls_b2 = cls_b.reshape(1, 2).astype(jnp.float32)
    class_labels2 = class_labels.reshape(B, 1).astype(jnp.int32)
    vmem = pl.BlockSpec(memory_space=pltpu.MemorySpace.VMEM)
    cls_logits, cls_loss = pl.pallas_call(
        _cls_head_kernel,
        out_shape=(
            jax.ShapeDtypeStruct((B, 2), jnp.float32),
            jax.ShapeDtypeStruct((1, 1), jnp.float32),
        ),
        in_specs=[vmem, vmem, vmem, vmem],
        out_specs=(vmem, vmem),
    )(pooled, cls_w.astype(jnp.float32), cls_b2, class_labels2)

    cls_loss_s = cls_loss[0, 0]
    total_loss = gen_loss * GEN_WEIGHT + cls_loss_s * CLS_WEIGHT

    return {
        "loss": total_loss,
        "logits": gen_logits,
        "cls_logits": cls_logits,
        "cls_loss": cls_loss_s,
        "gen_loss": gen_loss,
    }


if __name__ == "__main__":
    # Small shapes: batch=2, decoder seq=32, d_model=32, vocab=512, 2 classes.
    # Tiles tn=16, tv=128 -> grid (NC=2, Vt=4, R=2) so the weight-stationary
    # order, the parallel chunk axis and the stats combine are all exercised.
    B, T, D, V = 2, 32, 32, 512
    key = jax.random.PRNGKey(0)
    k_h, k_lm, k_cw, k_cb, k_lab, k_cls = jax.random.split(key, 6)

    # Synthetic last decoder hidden states (stand-in for the T5 backbone).
    hidden_states = jax.random.normal(k_h, (B, T, D), dtype=jnp.float32)
    lm_head_w = jax.random.normal(k_lm, (D, V), dtype=jnp.float32) * (1.0 / D ** 0.5)
    cls_w = jax.random.normal(k_cw, (D, 2), dtype=jnp.float32) * (1.0 / D ** 0.5)
    cls_b = jax.random.normal(k_cb, (2,), dtype=jnp.float32) * 0.01

    labels = jax.random.randint(k_lab, (B, T), 0, V, dtype=jnp.int32)
    labels = labels.at[0, T - 1].set(IGNORE_INDEX)  # one ignored (padding) token
    class_labels = jax.random.randint(k_cls, (B,), 0, 2, dtype=jnp.int32)

    out = mwr_forward(hidden_states, lm_head_w, labels, cls_w, cls_b,
                      class_labels, tile_n=16, tile_v=128, return_logits=True)
    jax.block_until_ready(out)

    # ---- sanity vs. a pure-JAX reference (bf16 matmul / f32 math, loose tol) ----
    h_bf = hidden_states.astype(jnp.bfloat16).reshape(B * T, D)
    w_bf = lm_head_w.astype(jnp.bfloat16)
    logits_ref = jnp.dot(h_bf, w_bf, preferred_element_type=jnp.float32)
    assert jnp.allclose(out["logits"].astype(jnp.float32).reshape(B * T, V),
                        logits_ref, atol=5e-2, rtol=5e-2)

    labels_flat = labels.reshape(-1)
    m = logits_ref.max(axis=-1, keepdims=True)
    lse_ref = (m + jnp.log(jnp.sum(jnp.exp(logits_ref - m), axis=-1,
                                   keepdims=True)))[:, 0]
    lab_ref = jnp.take_along_axis(logits_ref,
                                  jnp.clip(labels_flat, 0, V - 1)[:, None],
                                  axis=1)[:, 0]
    valid_ref = (labels_flat != IGNORE_INDEX).astype(jnp.float32)
    gen_loss_ref = (jnp.sum((lse_ref - lab_ref) * valid_ref)
                    / jnp.maximum(valid_ref.sum(), 1.0))
    assert jnp.allclose(out["gen_loss"], gen_loss_ref, atol=2e-2, rtol=2e-2)

    pooled_ref = hidden_states.mean(axis=1)
    cls_logits_ref = pooled_ref @ cls_w + cls_b
    assert jnp.allclose(out["cls_logits"], cls_logits_ref, atol=5e-2, rtol=5e-2)
    cm = cls_logits_ref.max(axis=-1, keepdims=True)
    clse = (cm + jnp.log(jnp.sum(jnp.exp(cls_logits_ref - cm), axis=-1,
                                 keepdims=True)))[:, 0]
    clab = jnp.take_along_axis(cls_logits_ref, class_labels[:, None], axis=1)[:, 0]
    cls_loss_ref = jnp.mean(clse - clab)
    assert jnp.allclose(out["cls_loss"], cls_loss_ref, atol=5e-2, rtol=5e-2)

    total_ref = gen_loss_ref * GEN_WEIGHT + cls_loss_ref * CLS_WEIGHT
    assert jnp.allclose(out["loss"], total_ref, atol=5e-2, rtol=5e-2)

    # ---- losses-only path (skips the (N, V) logits writeback) ----
    out2 = mwr_forward(hidden_states, lm_head_w, labels, cls_w, cls_b,
                       class_labels, tile_n=16, tile_v=128, return_logits=False)
    jax.block_until_ready((out2["loss"], out2["gen_loss"], out2["cls_loss"]))
    assert out2["logits"] is None
    assert jnp.allclose(out2["gen_loss"], gen_loss_ref, atol=2e-2, rtol=2e-2)
    assert jnp.allclose(out2["loss"], total_ref, atol=5e-2, rtol=5e-2)

    print("KERNEL_OK")
</pallas_src>

<mosaic_0001>
module attributes {stable_mosaic.version = 11 : i64} {
  func.func @kernel(%arg0: i32, %arg1: i32, %arg2: i32, %arg3: memref<16x32xbf16, #tpu.memory_space<vmem>>, %arg4: memref<32x128xbf16, #tpu.memory_space<vmem>>, %arg5: memref<16x1xi32, #tpu.memory_space<vmem>>, %arg6: memref<16x128xbf16, #tpu.memory_space<vmem>>, %arg7: memref<1x16x1xf32, #tpu.memory_space<vmem>>, %arg8: memref<1x16x1xf32, #tpu.memory_space<vmem>>, %arg9: memref<1x16x1xf32, #tpu.memory_space<vmem>>) attributes {dimension_semantics = [#tpu.dimension_semantics<parallel>, #tpu.dimension_semantics<arbitrary>, #tpu.dimension_semantics<arbitrary>], iteration_bounds = array<i64: 2, 4, 2>, scalar_prefetch = 0 : i64, scratch_operands = 0 : i64, tpu.core_type = #tpu.core_type<tc>, window_params = [{transform_indices = @transform_0, window_bounds = array<i64: 16, 32>}, {transform_indices = @transform_1, window_bounds = array<i64: 32, 128>}, {transform_indices = @transform_2, window_bounds = array<i64: 16, 1>}, {transform_indices = @transform_3, window_bounds = array<i64: 16, 128>}, {transform_indices = @transform_4, window_bounds = array<i64: 1, 16, 1>}, {transform_indices = @transform_5, window_bounds = array<i64: 1, 16, 1>}, {transform_indices = @transform_6, window_bounds = array<i64: 1, 16, 1>}]} {
    %c0 = arith.constant 0 : index
    %c0_0 = arith.constant 0 : index
    %0 = vector.load %arg3[%c0, %c0_0] : memref<16x32xbf16, #tpu.memory_space<vmem>>, vector<16x32xbf16>
    %c0_1 = arith.constant 0 : index
    %c0_2 = arith.constant 0 : index
    %1 = vector.load %arg4[%c0_1, %c0_2] : memref<32x128xbf16, #tpu.memory_space<vmem>>, vector<32x128xbf16>
    %cst = arith.constant dense<0.000000e+00> : vector<16x128xf32>
    %2 = tpu.matmul %0, %1, %cst {dimension_numbers = #tpu.dot_dimension_numbers<[1], [0], [0], [1], [0, 0, 1, 1], [], []>} : vector<16x32xbf16>, vector<32x128xbf16>, vector<16x128xf32> -> vector<16x128xf32>
    %3 = arith.truncf %2 : vector<16x128xf32> to vector<16x128xbf16>
    %c0_3 = arith.constant 0 : index
    %c0_4 = arith.constant 0 : index
    %4 = vector.load %arg6[%c0_3, %c0_4] : memref<16x128xbf16, #tpu.memory_space<vmem>>, vector<16x128xbf16>
    tpu.vector_store %arg6[%c0_3, %c0_4], %3 {strides = array<i32>} : memref<16x128xbf16, #tpu.memory_space<vmem>>, vector<16x128xbf16>,
    %c0_5 = arith.constant 0 : index
    %c0_6 = arith.constant 0 : index
    %5 = vector.load %arg5[%c0_5, %c0_6] : memref<16x1xi32, #tpu.memory_space<vmem>>, vector<16x1xi32>
    %c128_i32 = arith.constant 128 : i32
    %6 = arith.muli %arg1, %c128_i32 : i32
    %7 = vector.broadcast %6 : i32 to vector<16x1xi32>
    %8 = arith.subi %5, %7 : vector<16x1xi32>
    %9 = tpu.iota {dimensions = array<i32: 1>} : vector<16x128xi32>
    %cst_7 = arith.constant dense<0xFF800000> : vector<16xf32>
    %10 = vector.multi_reduction <maximumf>, %2, %cst_7 [1] : vector<16x128xf32> to vector<16xf32>
    %11 = vector.shape_cast %10 : vector<16xf32> to vector<16x1xf32>
    %12 = vector.broadcast %11 : vector<16x1xf32> to vector<16x128xf32>
    %13 = arith.subf %2, %12 : vector<16x128xf32>
    %14 = math.exp %13 : vector<16x128xf32>
    %cst_8 = arith.constant dense<0.000000e+00> : vector<16xf32>
    %15 = vector.multi_reduction <add>, %14, %cst_8 [1] : vector<16x128xf32> to vector<16xf32>
    %16 = vector.shape_cast %15 : vector<16xf32> to vector<16x1xf32>
    %17 = vector.broadcast %8 : vector<16x1xi32> to vector<16x128xi32>
    %18 = arith.cmpi eq, %9, %17 : vector<16x128xi32>
    %cst_9 = arith.constant 0.000000e+00 : f32
    %19 = vector.broadcast %cst_9 : f32 to vector<16x128xf32>
    %20 = arith.select %18, %2, %19 : vector<16x128xi1>, vector<16x128xf32>
    %cst_10 = arith.constant dense<0.000000e+00> : vector<16xf32>
    %21 = vector.multi_reduction <add>, %20, %cst_10 [1] : vector<16x128xf32> to vector<16xf32>
    %22 = vector.shape_cast %21 : vector<16xf32> to vector<16x1xf32>
    %c0_11 = arith.constant 0 : index
    %c0_12 = arith.constant 0 : index
    %c0_13 = arith.constant 0 : index
    %23 = vector.load %arg7[%c0_11, %c0_12, %c0_13] : memref<1x16x1xf32, #tpu.memory_space<vmem>>, vector<1x16x1xf32>
    %24 = vector.shape_cast %23 : vector<1x16x1xf32> to vector<16x1xf32>
    %25 = vector.shape_cast %11 : vector<16x1xf32> to vector<1x16x1xf32>
    tpu.vector_store %arg7[%c0_11, %c0_12, %c0_13], %25 {strides = array<i32>} : memref<1x16x1xf32, #tpu.memory_space<vmem>>, vector<1x16x1xf32>,
    %c0_14 = arith.constant 0 : index
    %c0_15 = arith.constant 0 : index
    %c0_16 = arith.constant 0 : index
    %26 = vector.load %arg8[%c0_14, %c0_15, %c0_16] : memref<1x16x1xf32, #tpu.memory_space<vmem>>, vector<1x16x1xf32>
    %27 = vector.shape_cast %26 : vector<1x16x1xf32> to vector<16x1xf32>
    %28 = vector.shape_cast %16 : vector<16x1xf32> to vector<1x16x1xf32>
    tpu.vector_store %arg8[%c0_14, %c0_15, %c0_16], %28 {strides = array<i32>} : memref<1x16x1xf32, #tpu.memory_space<vmem>>, vector<1x16x1xf32>,
    %c0_17 = arith.constant 0 : index
    %c0_18 = arith.constant 0 : index
    %c0_19 = arith.constant 0 : index
    %29 = vector.load %arg9[%c0_17, %c0_18, %c0_19] : memref<1x16x1xf32, #tpu.memory_space<vmem>>, vector<1x16x1xf32>
    %30 = vector.shape_cast %29 : vector<1x16x1xf32> to vector<16x1xf32>
    %31 = vector.shape_cast %22 : vector<16x1xf32> to vector<1x16x1xf32>
    tpu.vector_store %arg9[%c0_17, %c0_18, %c0_19], %31 {strides = array<i32>} : memref<1x16x1xf32, #tpu.memory_space<vmem>>, vector<1x16x1xf32>,
    return
  }
  func.func @transform_0(%arg0: i32, %arg1: i32, %arg2: i32) -> (i32, i32) {
    %c2_i32 = arith.constant 2 : i32
    %0 = arith.muli %arg0, %c2_i32 : i32
    %1 = arith.addi %0, %arg2 : i32
    %c0_i32 = arith.constant 0 : i32
    %c0_i32_0 = arith.constant 0 : i32
    return %1, %c0_i32 : i32, i32
  }
  func.func @transform_1(%arg0: i32, %arg1: i32, %arg2: i32) -> (i32, i32) {
    %c0_i32 = arith.constant 0 : i32
    %c0_i32_0 = arith.constant 0 : i32
    return %c0_i32, %arg1 : i32, i32
  }
  func.func @transform_2(%arg0: i32, %arg1: i32, %arg2: i32) -> (i32, i32) {
    %c2_i32 = arith.constant 2 : i32
    %0 = arith.muli %arg0, %c2_i32 : i32
    %1 = arith.addi %0, %arg2 : i32
    %c0_i32 = arith.constant 0 : i32
    %c0_i32_0 = arith.constant 0 : i32
    return %1, %c0_i32 : i32, i32
  }
  func.func @transform_3(%arg0: i32, %arg1: i32, %arg2: i32) -> (i32, i32) {
    %c2_i32 = arith.constant 2 : i32
    %0 = arith.muli %arg0, %c2_i32 : i32
    %1 = arith.addi %0, %arg2 : i32
    %c0_i32 = arith.constant 0 : i32
    return %1, %arg1 : i32, i32
  }
  func.func @transform_4(%arg0: i32, %arg1: i32, %arg2: i32) -> (i32, i32, i32) {
    %c2_i32 = arith.constant 2 : i32
    %0 = arith.muli %arg0, %c2_i32 : i32
    %1 = arith.addi %0, %arg2 : i32
    %c0_i32 = arith.constant 0 : i32
    %c0_i32_0 = arith.constant 0 : i32
    return %arg1, %1, %c0_i32 : i32, i32, i32
  }
  func.func @transform_5(%arg0: i32, %arg1: i32, %arg2: i32) -> (i32, i32, i32) {
    %c2_i32 = arith.constant 2 : i32
    %0 = arith.muli %arg0, %c2_i32 : i32
    %1 = arith.addi %0, %arg2 : i32
    %c0_i32 = arith.constant 0 : i32
    %c0_i32_0 = arith.constant 0 : i32
    return %arg1, %1, %c0_i32 : i32, i32, i32
  }
  func.func @transform_6(%arg0: i32, %arg1: i32, %arg2: i32) -> (i32, i32, i32) {
    %c2_i32 = arith.constant 2 : i32
    %0 = arith.muli %arg0, %c2_i32 : i32
    %1 = arith.addi %0, %arg2 : i32
    %c0_i32 = arith.constant 0 : i32
    %c0_i32_0 = arith.constant 0 : i32
    return %arg1, %1, %c0_i32 : i32, i32, i32
  }
}

</mosaic_0001>

<llo_original>
// kernel: tpu_custom_call.1
$region0: #{tpu_custom_call.1}
  #allocation0 [shape = 'u32[]', space=smem, size = 0x4, offset = 0x4, fixed_abs, tag = 'smem constant byte address 0x4 - core index']
  #allocation1 [shape = 'u32[144,128]{1,0:T(1,128)}', space=vmem, size = 0x12000, scoped, tag = 'internal scratch']
  %s0 = inlined_call_operand.vmem [shape: bf16[64,32], index: 0, kind: input, shape index: {}]
  %s1 = inlined_call_operand.vmem [shape: bf16[32,512], index: 1, kind: input, shape index: {}]
  %s2 = inlined_call_operand.vmem [shape: s32[64,1], index: 2, kind: input, shape index: {}]
  %s3 = inlined_call_operand.hbm [shape: bf16[64,512], index: 3, kind: output, shape index: {0}]
  %s4 = inlined_call_operand.vmem [shape: f32[4,64,1], index: 4, kind: output, shape index: {1}]
  %s5 = inlined_call_operand.vmem [shape: f32[4,64,1], index: 5, kind: output, shape index: {2}]
  %s6 = inlined_call_operand.vmem [shape: f32[4,64,1], index: 6, kind: output, shape index: {3}]
  %7 = xla_tuple %s3, %s4, %s5, %s6
  %s8 = sld [smem:[#allocation0]]
  $region110: #{tpu_custom_call.1} parent=0
    _
  %s10 = ssub.s32 1, %s8
  %s11 = scalar_select 0, %s10, %s8
  $region1: #{tpu_custom_call.1} parent=0
    #allocation2 [shape = 'u8[16384]{0}', space=vmem, size = 0x4000, scoped, tag = 'input window, operand 1']
    #allocation3 [shape = 'u8[8192]{0}', space=vmem, size = 0x2000, scoped, tag = 'output window, operand 0']
    #allocation4 [shape = 's32[2]{0}', space=sflag, size = 0x8, scoped, tag = 'scoped memory for tpu_custom_call.1']
    %12 = vsyncpa [#allocation4], 0
    %s13 = scalar_lea.sflag [#allocation4], 1
    %14 = vsyncpa %s13, 0
    loop: start=0, step=1, limit=18
    $region2: #{tpu_custom_call.1} parent=1 // loop_pre_header
      _
    $region3: #{tpu_custom_call.1} parent=1 // loop_header
      %s16 = sphi 0, %s20
      %p17 = scmp.ge.s32.totalorder %s16, 18
      %s23 = sphi 0, %s42
      %s24 = sphi 0, %s38
      %s25 = sphi 0, %s34
      %s26 = sphi 0, %s23
      %s27 = sphi 0, %s24
      %s28 = sphi 0, %s25
      %s29 = sphi 0, %s26
      %s30 = sphi 0, %s27
      %s31 = sphi 0, %s28
      %s49 = sphi 0, %s51
      %s52 = sphi 0, %s49
      %s53 = sphi 0, %s52
      %s69 = sphi 0, %s53
      %s75 = sphi 0, %s77
      %s78 = sphi 0, %s75
      %s79 = sphi 0, %s78
      %s95 = sphi 0, %s79
      %s105 = sphi 0, %s107
      %s108 = sphi 0, %s105
      %s109 = sphi 0, %s108
      %s125 = sphi 0, %s109
      %s137 = sphi 0, %s139
      %s140 = sphi 0, %s137
      %s141 = sphi 0, %s140
      %s157 = sphi 0, %s141
      %s169 = sphi 0, %s171
      %s172 = sphi 0, %s169
      %s173 = sphi 0, %s172
      %s189 = sphi 0, %s173
      %s201 = sphi 0, %s203
      %s204 = sphi 0, %s201
      %s205 = sphi 0, %s204
      %s221 = sphi 0, %s205
      %s233 = sphi 0, %s235
      %s236 = sphi 0, %s233
      %s237 = sphi 0, %s236
      %s253 = sphi 0, %s237
    $region4: #{tpu_custom_call.1} parent=1 // loop_header_branch
      %19 = sbr.rel (%p17) target = $region8
    $region5: #{tpu_custom_call.1} parent=1 // loop_body
      %s21 = ssub.s32 %s16, 1
      %s22 = ssub.s32 %s16, 2
      %s32 = sadd.s32 1, %s25
      %p33 = scmp.ge.s32.totalorder %s32, 2
      %s34 = scalar_select %p33, 0, %s32
      %s35 = sadd.s32 1, %s24
      %s36 = scalar_select %p33, %s35, %s24
      %p37 = scmp.ge.s32.totalorder %s36, 4
      %s38 = scalar_select %p37, 0, %s36
      %s39 = sadd.s32 1, %s23
      %s40 = scalar_select %p37, %s39, %s23
      %p41 = scmp.ge.s32.totalorder %s40, 2
      %s42 = scalar_select %p41, 0, %s40
      %s43 = smul.u32 %s23, 2
      %s44 = sadd.s32 %s43, %s25
      %s45 = smul.u32 %s42, 2
      %s46 = sadd.s32 %s45, %s34
      %s47 = ssub.s32 %s44, %s46
      %p48 = scmp.eq.s32.totalorder %s47, 0
      %s50 = sadd.s32 %s49, 1
      %s51 = scalar_select %p48, %s49, %s50
      %p54 = pneg %p48
      %p55 = scmp.eq.s32.totalorder %s16, 15
      %p56 = por %p54, %p55
      %p57 = scmp.ne.s32.totalorder %s49, %s52
      %p58 = scmp.eq.s32.totalorder %s16, 0
      %p59 = por %p57, %p58
      %p60 = scmp.ne.s32.totalorder %s49, %s52
      %p61 = scmp.eq.s32.totalorder %s21, 15
      %p62 = por %p60, %p61
      %p63 = scmp.ne.s32.totalorder %s52, %s53
      %p64 = scmp.eq.s32.totalorder %s21, 0
      %p65 = por %p63, %p64
      %p66 = scmp.ne.s32.totalorder %s52, %s53
      %p67 = scmp.eq.s32.totalorder %s22, 15
      %p68 = por %p66, %p67
      %p70 = scmp.ne.s32.totalorder %s53, %s69
      %p71 = scmp.eq.s32.totalorder %s22, 0
      %p72 = por %p70, %p71
      %s73 = ssub.s32 %s24, %s38
      %p74 = scmp.eq.s32.totalorder %s73, 0
      %s76 = sadd.s32 %s75, 1
      %s77 = scalar_select %p74, %s75, %s76
      %p80 = pneg %p74
      %p81 = scmp.eq.s32.totalorder %s16, 15
      %p82 = por %p80, %p81
      %p83 = scmp.ne.s32.totalorder %s75, %s78
      %p84 = scmp.eq.s32.totalorder %s16, 0
      %p85 = por %p83, %p84
      %p86 = scmp.ne.s32.totalorder %s75, %s78
      %p87 = scmp.eq.s32.totalorder %s21, 15
      %p88 = por %p86, %p87
      %p89 = scmp.ne.s32.totalorder %s78, %s79
      %p90 = scmp.eq.s32.totalorder %s21, 0
      %p91 = por %p89, %p90
      %p92 = scmp.ne.s32.totalorder %s78, %s79
      %p93 = scmp.eq.s32.totalorder %s22, 15
      %p94 = por %p92, %p93
      %p96 = scmp.ne.s32.totalorder %s79, %s95
      %p97 = scmp.eq.s32.totalorder %s22, 0
      %p98 = por %p96, %p97
      %s99 = smul.u32 %s23, 2
      %s100 = sadd.s32 %s99, %s25
      %s101 = smul.u32 %s42, 2
      %s102 = sadd.s32 %s101, %s34
      %s103 = ssub.s32 %s100, %s102
      %p104 = scmp.eq.s32.totalorder %s103, 0
      %s106 = sadd.s32 %s105, 1
      %s107 = scalar_select %p104, %s105, %s106
      %p110 = pneg %p104
      %p111 = scmp.eq.s32.totalorder %s16, 15
      %p112 = por %p110, %p111
      %p113 = scmp.ne.s32.totalorder %s105, %s108
      %p114 = scmp.eq.s32.totalorder %s16, 0
      %p115 = por %p113, %p114
      %p116 = scmp.ne.s32.totalorder %s105, %s108
      %p117 = scmp.eq.s32.totalorder %s21, 15
      %p118 = por %p116, %p117
      %p119 = scmp.ne.s32.totalorder %s108, %s109
      %p120 = scmp.eq.s32.totalorder %s21, 0
      %p121 = por %p119, %p120
      %p122 = scmp.ne.s32.totalorder %s108, %s109
      %p123 = scmp.eq.s32.totalorder %s22, 15
      %p124 = por %p122, %p123
      %p126 = scmp.ne.s32.totalorder %s109, %s125
      %p127 = scmp.eq.s32.totalorder %s22, 0
      %p128 = por %p126, %p127
      %s129 = smul.u32 %s23, 2
      %s130 = sadd.s32 %s129, %s25
      %s131 = smul.u32 %s42, 2
      %s132 = sadd.s32 %s131, %s34
      %s133 = ssub.s32 %s130, %s132
      %s134 = ssub.s32 %s24, %s38
      %s135 = sor.u32 %s133, %s134
      %p136 = scmp.eq.s32.totalorder %s135, 0
      %s138 = sadd.s32 %s137, 1
      %s139 = scalar_select %p136, %s137, %s138
      %p142 = pneg %p136
      %p143 = scmp.eq.s32.totalorder %s16, 15
      %p144 = por %p142, %p143
      %p145 = scmp.ne.s32.totalorder %s137, %s140
      %p146 = scmp.eq.s32.totalorder %s16, 0
      %p147 = por %p145, %p146
      %p148 = scmp.ne.s32.totalorder %s137, %s140
      %p149 = scmp.eq.s32.totalorder %s21, 15
      %p150 = por %p148, %p149
      %p151 = scmp.ne.s32.totalorder %s140, %s141
      %p152 = scmp.eq.s32.totalorder %s21, 0
      %p153 = por %p151, %p152
      %p154 = scmp.ne.s32.totalorder %s140, %s141
      %p155 = scmp.eq.s32.totalorder %s22, 15
      %p156 = por %p154, %p155
      %p158 = scmp.ne.s32.totalorder %s141, %s157
      %p159 = scmp.eq.s32.totalorder %s22, 0
      %p160 = por %p158, %p159
      %s161 = smul.u32 %s23, 2
      %s162 = sadd.s32 %s161, %s25
      %s163 = smul.u32 %s42, 2
      %s164 = sadd.s32 %s163, %s34
      %s165 = ssub.s32 %s24, %s38
      %s166 = ssub.s32 %s162, %s164
      %s167 = sor.u32 %s165, %s166
      %p168 = scmp.eq.s32.totalorder %s167, 0
      %s170 = sadd.s32 %s169, 1
      %s171 = scalar_select %p168, %s169, %s170
      %p174 = pneg %p168
      %p175 = scmp.eq.s32.totalorder %s16, 15
      %p176 = por %p174, %p175
      %p177 = scmp.ne.s32.totalorder %s169, %s172
      %p178 = scmp.eq.s32.totalorder %s16, 0
      %p179 = por %p177, %p178
      %p180 = scmp.ne.s32.totalorder %s169, %s172
      %p181 = scmp.eq.s32.totalorder %s21, 15
      %p182 = por %p180, %p181
      %p183 = scmp.ne.s32.totalorder %s172, %s173
      %p184 = scmp.eq.s32.totalorder %s21, 0
      %p185 = por %p183, %p184
      %p186 = scmp.ne.s32.totalorder %s172, %s173
      %p187 = scmp.eq.s32.totalorder %s22, 15
      %p188 = por %p186, %p187
      %p190 = scmp.ne.s32.totalorder %s173, %s189
      %p191 = scmp.eq.s32.totalorder %s22, 0
      %p192 = por %p190, %p191
      %s193 = smul.u32 %s23, 2
      %s194 = sadd.s32 %s193, %s25
      %s195 = smul.u32 %s42, 2
      %s196 = sadd.s32 %s195, %s34
      %s197 = ssub.s32 %s24, %s38
      %s198 = ssub.s32 %s194, %s196
      %s199 = sor.u32 %s197, %s198
      %p200 = scmp.eq.s32.totalorder %s199, 0
      %s202 = sadd.s32 %s201, 1
      %s203 = scalar_select %p200, %s201, %s202
      %p206 = pneg %p200
      %p207 = scmp.eq.s32.totalorder %s16, 15
      %p208 = por %p206, %p207
      %p209 = scmp.ne.s32.totalorder %s201, %s204
      %p210 = scmp.eq.s32.totalorder %s16, 0
      %p211 = por %p209, %p210
      %p212 = scmp.ne.s32.totalorder %s201, %s204
      %p213 = scmp.eq.s32.totalorder %s21, 15
      %p214 = por %p212, %p213
      %p215 = scmp.ne.s32.totalorder %s204, %s205
      %p216 = scmp.eq.s32.totalorder %s21, 0
      %p217 = por %p215, %p216
      %p218 = scmp.ne.s32.totalorder %s204, %s205
      %p219 = scmp.eq.s32.totalorder %s22, 15
      %p220 = por %p218, %p219
      %p222 = scmp.ne.s32.totalorder %s205, %s221
      %p223 = scmp.eq.s32.totalorder %s22, 0
      %p224 = por %p222, %p223
      %s225 = smul.u32 %s23, 2
      %s226 = sadd.s32 %s225, %s25
      %s227 = smul.u32 %s42, 2
      %s228 = sadd.s32 %s227, %s34
      %s229 = ssub.s32 %s24, %s38
      %s230 = ssub.s32 %s226, %s228
      %s231 = sor.u32 %s229, %s230
      %p232 = scmp.eq.s32.totalorder %s231, 0
      %s234 = sadd.s32 %s233, 1
      %s235 = scalar_select %p232, %s233, %s234
      %p238 = pneg %p232
      %p239 = scmp.eq.s32.totalorder %s16, 15
      %p240 = por %p238, %p239
      %p241 = scmp.ne.s32.totalorder %s233, %s236
      %p242 = scmp.eq.s32.totalorder %s16, 0
      %p243 = por %p241, %p242
      %p244 = scmp.ne.s32.totalorder %s233, %s236
      %p245 = scmp.eq.s32.totalorder %s21, 15
      %p246 = por %p244, %p245
      %p247 = scmp.ne.s32.totalorder %s236, %s237
      %p248 = scmp.eq.s32.totalorder %s21, 0
      %p249 = por %p247, %p248
      %p250 = scmp.ne.s32.totalorder %s236, %s237
      %p251 = scmp.eq.s32.totalorder %s22, 15
      %p252 = por %p250, %p251
      %p254 = scmp.ne.s32.totalorder %s237, %s253
      %p255 = scmp.eq.s32.totalorder %s22, 0
      %p256 = por %p254, %p255
      %p257 = scmp.le.s32.totalorder 1, %s16
      %p258 = scmp.lt.s32.totalorder %s16, 17
      %p259 = pnand %p257, %p258
      %p260 = pneg %p259
      // Predicated region
      $region9: #{tpu_custom_call.1} parent=5 // pred_check
        _
      $region10: #{tpu_custom_call.1} parent=5 // pred_check_branch
        %262 = sbr.rel (%p259) target = $region12
      $region11: #{tpu_custom_call.1} parent=5 // pred_region
        %s263 = ssub.s32 %s16, 1
      $region12: #{tpu_custom_call.1} parent=5 // pred_fallthru
        _
      %p264 = scmp.lt.s32.totalorder %s16, 16
      // Predicated region
      $region13: #{tpu_custom_call.1} parent=5 // pred_check
        %p265 = pneg %p264
      $region14: #{tpu_custom_call.1} parent=5 // pred_check_branch
        %267 = sbr.rel (%p265) target = $region16
      $region15: #{tpu_custom_call.1} parent=5 // pred_region
        // Predicated region
        $region17: #{tpu_custom_call.1} parent=15 // pred_check
          %p268 = pneg %p59
        $region18: #{tpu_custom_call.1} parent=15 // pred_check_branch
          %270 = sbr.rel (%p268) target = $region20
        $region19: #{tpu_custom_call.1} parent=15 // pred_region
          %s271 = smul.u32 %s23, 2
          %s272 = sadd.s32 %s271, %s25
          %s273 = smul.u32 2, %s272
          %p274 = scmp.lt.s32.totalorder %s273, 7
          %s275 = scalar_select %p274, %s273, 7
          %s276 = smul.addr %s275, 4
          %s277 = scalar_lea.vmem %s0, %s276
          %s278 = smul.u32 %s23, 2
          %s279 = sadd.s32 %s278, %s25
          %s280 = smul.u32 2, %s279
        $region20: #{tpu_custom_call.1} parent=15 // pred_fallthru
          _
        // Predicated region
        $region21: #{tpu_custom_call.1} parent=15 // pred_check
          %p281 = pneg %p85
        $region22: #{tpu_custom_call.1} parent=15 // pred_check_branch
          %283 = sbr.rel (%p281) target = $region24
        $region23: #{tpu_custom_call.1} parent=15 // pred_region
          %s284 = sand.u32 %s75, 1
          %s285 = sand.u32 %s75, 1
          %s286 = smul.addr %s285, 16
          %s287 = scalar_lea.vmem [#allocation2], %s286
          %s288 = smul.addr %s24, 4
          %s289 = scalar_lea.vmem %s1, %s288
          // Predicated region
          $region25: #{tpu_custom_call.1} parent=23 // pred_check
            _
          $region26: #{tpu_custom_call.1} parent=23 // pred_check_branch
            %291 = sbr.rel (0) target = $region28
          $region27: #{tpu_custom_call.1} parent=23 // pred_region
            // Predicated region
            $region29: #{tpu_custom_call.1} parent=27 // pred_check
              _
            $region30: #{tpu_custom_call.1} parent=27 // pred_check_branch
              %293 = sbr.rel target = $region32
            $region31: #{tpu_custom_call.1} parent=27 // pred_region
              // Predicated region
              $region44: #{tpu_custom_call.1} parent=31 // pred_check
                _
              $region45: #{tpu_custom_call.1} parent=31 // pred_check_branch
                %314 = sbr.rel (0) target = $region47
              $region46: #{tpu_custom_call.1} parent=31 // pred_region
                loop: start=0, step=1, limit=1
                $region48: #{tpu_custom_call.1} parent=46 // loop_pre_header
                  _
                $region49: #{tpu_custom_call.1} parent=46 // loop_header
                  %s316 = sphi 0, %s320
                  %p317 = scmp.ge.s32.totalorder %s316, 1
                  %s321 = sphi %s289, %s289
                  %s322 = sphi %s287, %s287
                $region50: #{tpu_custom_call.1} parent=46 // loop_header_branch
                  %319 = sbr.rel (%p317) target = $region54
                $region51: #{tpu_custom_call.1} parent=46 // loop_body
                  _
                $region52: #{tpu_custom_call.1} parent=46 // loop_footer
                  %s320 = sadd.s32 1, %s316
                $region53: #{tpu_custom_call.1} parent=46 // loop_footer_branch
                  %315 = sbr.rel target = $region49
                $region54: #{tpu_custom_call.1} parent=46 // loop_exit
                  _
                loop: start=0, step=1, limit=1
                $region55: #{tpu_custom_call.1} parent=46 // loop_pre_header
                  _
                $region56: #{tpu_custom_call.1} parent=46 // loop_header
                  %s325 = sphi 0, %s329
                  %p326 = scmp.ge.s32.totalorder %s325, 1
                  %s330 = sphi %s289, %s289
                  %s331 = sphi %s287, %s287
                $region57: #{tpu_custom_call.1} parent=46 // loop_header_branch
                  %328 = sbr.rel (%p326) target = $region61
                $region58: #{tpu_custom_call.1} parent=46 // loop_body
                  %v332 = vld [vmem:[%s330] sm:$0xf]
                  %333 = vst [vmem:[%s331] sm:$0xf] %v332
                  %v334 = vld [vmem:[%s330 + $0x10] sm:$0xf]
                  %335 = vst [vmem:[%s331 + $0x4] sm:$0xf] %v334
                  %v336 = vld [vmem:[%s330 + $0x20] sm:$0xf]
                  %337 = vst [vmem:[%s331 + $0x8] sm:$0xf] %v336
                  %v338 = vld [vmem:[%s330 + $0x30] sm:$0xf]
                  %339 = vst [vmem:[%s331 + $0xc] sm:$0xf] %v338
                $region59: #{tpu_custom_call.1} parent=46 // loop_footer
                  %s329 = sadd.s32 1, %s325
                $region60: #{tpu_custom_call.1} parent=46 // loop_footer_branch
                  %324 = sbr.rel target = $region56
                $region61: #{tpu_custom_call.1} parent=46 // loop_exit
                  _
              $region47: #{tpu_custom_call.1} parent=31 // pred_fallthru
                _
            $region32: #{tpu_custom_call.1} parent=27 // pred_fallthru
              _
            // Predicated region
            $region33: #{tpu_custom_call.1} parent=27 // pred_check
              _
            $region34: #{tpu_custom_call.1} parent=27 // pred_check_branch
              %295 = sbr.rel (0) target = $region36
            $region35: #{tpu_custom_call.1} parent=27 // pred_region
              loop: start=0, step=1, limit=1
              $region37: #{tpu_custom_call.1} parent=35 // loop_pre_header
                _
              $region38: #{tpu_custom_call.1} parent=35 // loop_header
                %s298 = sphi 0, %s302
                %p299 = scmp.ge.s32.totalorder %s298, 1
                %s303 = sphi %s289, %s289
                %s304 = sphi %s287, %s287
              $region39: #{tpu_custom_call.1} parent=35 // loop_header_branch
                %301 = sbr.rel (%p299) target = $region43
              $region40: #{tpu_custom_call.1} parent=35 // loop_body
                %v305 = vld [vmem:[%s303] sm:$0xf]
                %306 = vst [vmem:[%s304] sm:$0xf] %v305
                %v307 = vld [vmem:[%s303 + $0x10] sm:$0xf]
                %308 = vst [vmem:[%s304 + $0x4] sm:$0xf] %v307
                %v309 = vld [vmem:[%s303 + $0x20] sm:$0xf]
                %310 = vst [vmem:[%s304 + $0x8] sm:$0xf] %v309
                %v311 = vld [vmem:[%s303 + $0x30] sm:$0xf]
                %312 = vst [vmem:[%s304 + $0xc] sm:$0xf] %v311
              $region41: #{tpu_custom_call.1} parent=35 // loop_footer
                %s302 = sadd.s32 1, %s298
              $region42: #{tpu_custom_call.1} parent=35 // loop_footer_branch
                %297 = sbr.rel target = $region38
              $region43: #{tpu_custom_call.1} parent=35 // loop_exit
                _
            $region36: #{tpu_custom_call.1} parent=27 // pred_fallthru
              _
          $region28: #{tpu_custom_call.1} parent=23 // pred_fallthru
            _
          %340 = vnop
        $region24: #{tpu_custom_call.1} parent=15 // pred_fallthru
          _
        // Predicated region
        $region62: #{tpu_custom_call.1} parent=15 // pred_check
          %p341 = pneg %p115
        $region63: #{tpu_custom_call.1} parent=15 // pred_check_branch
          %343 = sbr.rel (%p341) target = $region65
        $region64: #{tpu_custom_call.1} parent=15 // pred_region
          %s344 = smul.u32 %s23, 2
          %s345 = sadd.s32 %s344, %s25
          %s346 = smul.u32 2, %s345
          %p347 = scmp.lt.s32.totalorder %s346, 7
          %s348 = scalar_select %p347, %s346, 7
          %s349 = smul.addr %s348, 8
          %s350 = scalar_lea.vmem %s2, %s349
          %s351 = smul.u32 %s23, 2
          %s352 = sadd.s32 %s351, %s25
          %s353 = smul.u32 2, %s352
        $region65: #{tpu_custom_call.1} parent=15 // pred_fallthru
          _
      $region16: #{tpu_custom_call.1} parent=5 // pred_fallthru
        _
      %p354 = scmp.le.s32.totalorder 1, %s16
      %p355 = scmp.lt.s32.totalorder %s16, 17
      %p356 = pnand %p354, %p355
      %p357 = pneg %p356
      // Predicated region
      $region66: #{tpu_custom_call.1} parent=5 // pred_check
        _
      $region67: #{tpu_custom_call.1} parent=5 // pred_check_branch
        %359 = sbr.rel (%p356) target = $region69
      $region68: #{tpu_custom_call.1} parent=5 // pred_region
        %s360 = ssub.s32 %s16, 1
        %s361 = sand.u32 %s78, 1
        %s362 = sand.u32 %s78, 1
        %s363 = smul.addr %s362, 16
        %s364 = scalar_lea.vmem [#allocation2], %s363
        // Predicated region
        $region70: #{tpu_custom_call.1} parent=68 // pred_check
          %p365 = pneg %p91
        $region71: #{tpu_custom_call.1} parent=68 // pred_check_branch
          %367 = sbr.rel (%p365) target = $region73
        $region72: #{tpu_custom_call.1} parent=68 // pred_region
          _
        $region73: #{tpu_custom_call.1} parent=68 // pred_fallthru
          _
        %s368 = smul.u32 %s26, 2
        %s369 = sadd.s32 %s368, %s28
        %s370 = smul.u32 2, %s369
        %p371 = scmp.lt.s32.totalorder %s370, 7
        %s372 = scalar_select %p371, %s370, 7
        %s373 = smul.addr %s372, 4
        %s374 = scalar_lea.vmem %s0, %s373
        %p375 = pneg %p65
        %p376 = pneg %p62
        %s377 = sand.u32 %s78, 1
        %s378 = sand.u32 %s78, 1
        %s379 = smul.addr %s378, 16
        %s380 = scalar_lea.vmem [#allocation2], %s379
        %p381 = pneg %p91
        %p382 = pneg %p88
        %s383 = smul.u32 %s26, 2
        %s384 = sadd.s32 %s383, %s28
        %s385 = smul.u32 2, %s384
        %p386 = scmp.lt.s32.totalorder %s385, 7
        %s387 = scalar_select %p386, %s385, 7
        %s388 = smul.addr %s387, 8
        %s389 = scalar_lea.vmem %s2, %s388
        %p390 = pneg %p121
        %p391 = pneg %p118
        %p392 = pneg %p153
        %p393 = pneg %p150
        %s394 = sand.u32 %s140, 1
        %s395 = scalar_lea.sflag [#allocation4], %s394
        %s396 = sand.u32 %s140, 1
        %s397 = smul.addr %s396, 8
        %s398 = scalar_lea.vmem [#allocation3], %s397
        %p399 = pneg %p185
        %p400 = pneg %p182
        %s401 = smul.u32 %s26, 2
        %s402 = sadd.s32 %s401, %s28
        %s403 = smul.u32 2, %s402
        %p404 = scmp.lt.s32.totalorder %s27, 3
        %s405 = scalar_select %p404, %s27, 3
        %p406 = scmp.lt.s32.totalorder %s403, 7
        %s407 = scalar_select %p406, %s403, 7
        %s408 = smul.addr %s405, 8
        %s409 = sadd.s32 %s407, %s408
        %s410 = smul.addr %s409, 8
        %s411 = scalar_lea.vmem %s4, %s410
        %p412 = pneg %p217
        %p413 = pneg %p214
        %s414 = smul.u32 %s26, 2
        %s415 = sadd.s32 %s414, %s28
        %s416 = smul.u32 2, %s415
        %p417 = scmp.lt.s32.totalorder %s27, 3
        %s418 = scalar_select %p417, %s27, 3
        %p419 = scmp.lt.s32.totalorder %s416, 7
        %s420 = scalar_select %p419, %s416, 7
        %s421 = smul.addr %s418, 8
        %s422 = sadd.s32 %s420, %s421
        %s423 = smul.addr %s422, 8
        %s424 = scalar_lea.vmem %s5, %s423
        %p425 = pneg %p249
        %p426 = pneg %p246
        %s427 = smul.u32 %s26, 2
        %s428 = sadd.s32 %s427, %s28
        %s429 = smul.u32 2, %s428
        %p430 = scmp.lt.s32.totalorder %s27, 3
        %s431 = scalar_select %p430, %s27, 3
        %p432 = scmp.lt.s32.totalorder %s429, 7
        %s433 = scalar_select %p432, %s429, 7
        %s434 = smul.addr %s431, 8
        %s435 = sadd.s32 %s433, %s434
        %s436 = smul.addr %s435, 8
        %s437 = scalar_lea.vmem %s6, %s436
        %s438 = smul.u32 %s26, 2
        %s439 = sadd.s32 %s438, %s28
        %s440 = smul.u32 2, %s439
        %p441 = scmp.lt.s32.totalorder %s440, 7
        %s442 = scalar_select %p441, %s440, 7
        %s443 = smul.addr %s442, 4
        %s444 = scalar_lea.vmem %s0, %s443
        %s445 = smul.u32 %s26, 2
        %s446 = sadd.s32 %s445, %s28
        %s447 = smul.u32 2, %s446
        %s448 = smul.u32 %s26, 2
        %s449 = sadd.s32 %s448, %s28
        %s450 = smul.u32 2, %s449
        %p451 = scmp.lt.s32.totalorder %s450, 7
        %s452 = scalar_select %p451, %s450, 7
        %s453 = smul.addr %s452, 8
        %s454 = scalar_lea.vmem %s2, %s453
        %s455 = smul.u32 %s26, 2
        %s456 = sadd.s32 %s455, %s28
        %s457 = smul.u32 2, %s456
        %s458 = smul.u32 %s26, 2
        %s459 = sadd.s32 %s458, %s28
        %s460 = smul.u32 2, %s459
        %s461 = smul.u32 %s26, 2
        %s462 = sadd.s32 %s461, %s28
        %s463 = smul.u32 2, %s462
        %p464 = scmp.lt.s32.totalorder %s27, 3
        %s465 = scalar_select %p464, %s27, 3
        %p466 = scmp.lt.s32.totalorder %s463, 7
        %s467 = scalar_select %p466, %s463, 7
        %s468 = smul.addr %s465, 8
        %s469 = sadd.s32 %s467, %s468
        %s470 = smul.addr %s469, 8
        %s471 = scalar_lea.vmem %s4, %s470
        %s472 = smul.u32 %s26, 2
        %s473 = sadd.s32 %s472, %s28
        %s474 = smul.u32 2, %s473
        %s475 = smul.u32 %s26, 2
        %s476 = sadd.s32 %s475, %s28
        %s477 = smul.u32 2, %s476
        %p478 = scmp.lt.s32.totalorder %s27, 3
        %s479 = scalar_select %p478, %s27, 3
        %p480 = scmp.lt.s32.totalorder %s477, 7
        %s481 = scalar_select %p480, %s477, 7
        %s482 = smul.addr %s479, 8
        %s483 = sadd.s32 %s481, %s482
        %s484 = smul.addr %s483, 8
        %s485 = scalar_lea.vmem %s5, %s484
        %s486 = smul.u32 %s26, 2
        %s487 = sadd.s32 %s486, %s28
        %s488 = smul.u32 2, %s487
        %s489 = smul.u32 %s26, 2
        %s490 = sadd.s32 %s489, %s28
        %s491 = smul.u32 2, %s490
        %p492 = scmp.lt.s32.totalorder %s27, 3
        %s493 = scalar_select %p492, %s27, 3
        %p494 = scmp.lt.s32.totalorder %s491, 7
        %s495 = scalar_select %p494, %s491, 7
        %s496 = smul.addr %s493, 8
        %s497 = sadd.s32 %s495, %s496
        %s498 = smul.addr %s497, 8
        %s499 = scalar_lea.vmem %s6, %s498
        %s500 = smul.u32 %s26, 2
        %s501 = sadd.s32 %s500, %s28
        %s502 = smul.u32 2, %s501
        %v504 = vld [vmem:[%s444] sm:$0xf]
        %v505 = vld [vmem:[%s444 + $0x4] sm:$0xf]
        %v506 = vld [vmem:[%s364] sm:$0xf]
        %v507 = vld [vmem:[%s364 + $0x4] sm:$0xf]
        %v508 = vld [vmem:[%s364 + $0x8] sm:$0xf]
        %v509 = vld [vmem:[%s364 + $0xc] sm:$0xf]
        %v512 = vunpack.c.l.b16 %v504
        %v513 = vunpack.c.l.b16 %v505
        %v514 = vpack.c.b16 %v513, %v512
        %v519 = vunpack.c.l.b16 %v506
        %v520 = vunpack.c.l.b16 %v507
        %v521 = vunpack.c.l.b16 %v508
        %v522 = vunpack.c.l.b16 %v509
        %v523 = vpack.c.b16 %v520, %v519
        %v524 = vpack.c.b16 %v522, %v521
        %vm527 = vcmask 261120
        %v529 = vsel %vm527, %v514, 0
        %531 = vmatprep.subr.bf16.mxu0 0
        %532 = vmatpush1.bf16.msra.mxu0 %v523
        %533 = vmatprep.subr.bf16.mxu0 0
        %534 = vmatpush1.bf16.msra.mxu0 %v524
        %535 = vmatprep.subr.bf16.mxu0 0
        %536 = vmatpush1.bf16.msra.mxu0 0
        %537 = vmatprep.subr.bf16.mxu0 0
        %538 = vmatpush1.bf16.msra.mxu0 0
        %539 = vmatprep.subr.bf16.mxu0 0
        %540 = vmatpush1.bf16.msra.mxu0 0
        %541 = vmatprep.subr.bf16.mxu0 0
        %542 = vmatpush1.bf16.msra.mxu0 0
        %543 = vmatprep.subr.bf16.mxu0 0
        %544 = vmatpush1.bf16.msra.mxu0 0
        %545 = vmatprep.subr.bf16.mxu0 0
        %546 = vmatpush1.bf16.msra.mxu0 0
        %547 = vmatprep.subr.bf16.mxu0 0
        %548 = vmatpush1.bf16.msra.mxu0 0
        %549 = vmatprep.subr.bf16.mxu0 0
        %550 = vmatpush1.bf16.msra.mxu0 0
        %551 = vmatprep.subr.bf16.mxu0 0
        %552 = vmatpush1.bf16.msra.mxu0 0
        %553 = vmatprep.subr.bf16.mxu0 0
        %554 = vmatpush1.bf16.msra.mxu0 0
        %555 = vmatprep.subr.bf16.mxu0 0
        %556 = vmatpush1.bf16.msra.mxu0 0
        %557 = vmatprep.subr.bf16.mxu0 0
        %558 = vmatpush1.bf16.msra.mxu0 0
        %559 = vmatprep.subr.bf16.mxu0 0
        %560 = vmatpush1.bf16.msra.mxu0 0
        %561 = vmatprep.subr.bf16.mxu0 0
        %562 = vmatpush1.bf16.msra.mxu0 0
        %563 = vmatprep.mubr.bf16.mxu0 0
        %564 = vmatmul.mubr.bf16.gmra.mrb[0].mxu0 %v529
        %v565 = vpop.f32.mrb[0].mxu0
        %v566 = vadd.f32 0.0, %v565
        %v567 = vpop.f32.mrb[0].mxu0
        %v568 = vpop.f32.mrb[0].mxu0
        %v569 = vadd.f32 0.0, %v568
        %v570 = vpop.f32.mrb[0].mxu0
        %571 = vdwg.mxu0
        %v572 = vpack.c.bf16 %v569, %v566
        %v574 = vunpack.c.l.b16 %v572
        %v575 = vunpack.c.h.b16 %v572
        %v576 = vpack.c.b16 %v574, %v574
        %v577 = vpack.c.b16 %v575, %v575
        %580 = vst [vmem:[%s398] sm:$0xf] %v576
        %581 = vst [vmem:[%s398 + $0x4] sm:$0xf] %v577
        %v582 = vld [vmem:[%s454] sm:$0xff]
        %v583 = vld [vmem:[%s454 + $0x8] sm:$0xff]
        %s584 = smul.u32 %s27, 128
        %v585 = vstv %s584
        %v586 = vsub.s32 %v582, %v585
        %v587 = vsub.s32 %v583, %v585
        %v588 = vlaneseq
        %v589 = vand.u32 %v588, 127
        %590 = vmax.xlane.f32.xlu0 %v566
        %v591 = vpop.xlane.xlu0 %590
        %592 = vmax.xlane.f32.xlu0 %v569
        %v593 = vpop.xlane.xlu0 %592
        %v594 = vsub.f32 %v566, %v591
        %v595 = vsub.f32 %v569, %v593
        %v596 = vmul.f32 %v594, 1.442695
        %v597 = vpow.pop %v596
        %v598 = vmul.f32 %v595, 1.442695
        %v599 = vpow.pop %v598
        %600 = vadd.xlane.f32.xlu0 %v597
        %v601 = vpop.xlane.xlu0 %600
        %602 = vadd.xlane.f32.xlu0 %v599
        %v603 = vpop.xlane.xlu0 %602
        %604 = vset.pattern.permute.xlu0 0
        %605 = vperm.xlu0 %604, %v586
        %v606 = vpop.permute.xlu0 %605
        %607 = vset.pattern.permute.xlu0 0
        %608 = vperm.xlu0 %607, %v587
        %v609 = vpop.permute.xlu0 %608
        %vm610 = vcmp.eq.s32.totalorder %v589, %v606
        %vm611 = vcmp.eq.s32.totalorder %v589, %v609
        %v612 = vsel %vm610, %v566, 0.0
        %v613 = vsel %vm611, %v569, 0.0
        %614 = vadd.xlane.f32.xlu0 %v612
        %v615 = vpop.xlane.xlu0 %614
        %616 = vadd.xlane.f32.xlu0 %v613
        %v617 = vpop.xlane.xlu0 %616
        %vm618 = vcmask 7168
        %619 = vst.msk [vmem:[%s471] sm:$0xff] %vm618, %v591
        %620 = vst.msk [vmem:[%s471 + $0x8] sm:$0xff] %vm618, %v593
        %621 = vst.msk [vmem:[%s485] sm:$0xff] %vm618, %v601
        %622 = vst.msk [vmem:[%s485 + $0x8] sm:$0xff] %vm618, %v603
        %623 = vst.msk [vmem:[%s499] sm:$0xff] %vm618, %v615
        %624 = vst.msk [vmem:[%s499 + $0x8] sm:$0xff] %vm618, %v617
        %s625 = sand.u32 %s140, 1
        %s626 = scalar_lea.sflag [#allocation4], %s625
        %s627 = sand.u32 %s140, 1
        %s628 = smul.addr %s627, 8
        %s629 = scalar_lea.vmem [#allocation3], %s628
        %s630 = smul.u32 %s26, 2
        %s631 = sadd.s32 %s630, %s28
        %s632 = smul.u32 2, %s631
        %p633 = scmp.lt.s32.totalorder %s27, 3
        %s634 = scalar_select %p633, %s27, 3
        %p635 = scmp.lt.s32.totalorder %s632, 7
        %s636 = scalar_select %p635, %s632, 7
        %s637 = smul.addr %s634, 8
        %s638 = sadd.s32 %s636, %s637
        %s639 = smul.addr %s638, 8
        %s640 = scalar_lea.vmem %s4, %s639
        %s641 = smul.u32 %s26, 2
        %s642 = sadd.s32 %s641, %s28
        %s643 = smul.u32 2, %s642
        %p644 = scmp.lt.s32.totalorder %s27, 3
        %s645 = scalar_select %p644, %s27, 3
        %p646 = scmp.lt.s32.totalorder %s643, 7
        %s647 = scalar_select %p646, %s643, 7
        %s648 = smul.addr %s645, 8
        %s649 = sadd.s32 %s647, %s648
        %s650 = smul.addr %s649, 8
        %s651 = scalar_lea.vmem %s5, %s650
        %s652 = smul.u32 %s26, 2
        %s653 = sadd.s32 %s652, %s28
        %s654 = smul.u32 2, %s653
        %p655 = scmp.lt.s32.totalorder %s27, 3
        %s656 = scalar_select %p655, %s27, 3
        %p657 = scmp.lt.s32.totalorder %s654, 7
        %s658 = scalar_select %p657, %s654, 7
        %s659 = smul.addr %s656, 8
        %s660 = sadd.s32 %s658, %s659
        %s661 = smul.addr %s660, 8
        %s662 = scalar_lea.vmem %s6, %s661
        // Predicated region
        $region74: #{tpu_custom_call.1} parent=68 // pred_check
          %p663 = pneg %p150
        $region75: #{tpu_custom_call.1} parent=68 // pred_check_branch
          %665 = sbr.rel (%p663) target = $region77
        $region76: #{tpu_custom_call.1} parent=68 // pred_region
          %s666 = smul.u32 %s26, 2
          %s667 = sadd.s32 %s666, %s28
          %s668 = smul.u32 2, %s667
          %s670 = ssub.s32 128, 128
          %671 = vsyncadd %s626, %s670
          %s672 = smul.addr %s668, 4
          %s673 = sadd.s32 %s27, %s672
          %s674 = smul.addr %s673, 64
          %s675 = scalar_lea.hbm %s3, %s674
          %s676 = sshll.u32 %s629, 4
          %s677 = int_to_ptr.vmem [resolvable:$true] %s676
          %682 = dma.vmem_to_hbm [thread:$0]  %s677, 128, %s675, %s626, 64, 256, 4
        $region77: #{tpu_custom_call.1} parent=68 // pred_fallthru
          _
        // Predicated region
        $region78: #{tpu_custom_call.1} parent=68 // pred_check
          %p683 = pneg %p182
        $region79: #{tpu_custom_call.1} parent=68 // pred_check_branch
          %685 = sbr.rel (%p683) target = $region81
        $region80: #{tpu_custom_call.1} parent=68 // pred_region
          %s686 = smul.u32 %s26, 2
          %s687 = sadd.s32 %s686, %s28
          %s688 = smul.u32 2, %s687
        $region81: #{tpu_custom_call.1} parent=68 // pred_fallthru
          _
        // Predicated region
        $region82: #{tpu_custom_call.1} parent=68 // pred_check
          %p689 = pneg %p214
        $region83: #{tpu_custom_call.1} parent=68 // pred_check_branch
          %691 = sbr.rel (%p689) target = $region85
        $region84: #{tpu_custom_call.1} parent=68 // pred_region
          %s692 = smul.u32 %s26, 2
          %s693 = sadd.s32 %s692, %s28
          %s694 = smul.u32 2, %s693
        $region85: #{tpu_custom_call.1} parent=68 // pred_fallthru
          _
        // Predicated region
        $region86: #{tpu_custom_call.1} parent=68 // pred_check
          %p695 = pneg %p246
        $region87: #{tpu_custom_call.1} parent=68 // pred_check_branch
          %697 = sbr.rel (%p695) target = $region89
        $region88: #{tpu_custom_call.1} parent=68 // pred_region
          %s698 = smul.u32 %s26, 2
          %s699 = sadd.s32 %s698, %s28
          %s700 = smul.u32 2, %s699
        $region89: #{tpu_custom_call.1} parent=68 // pred_fallthru
          _
      $region69: #{tpu_custom_call.1} parent=5 // pred_fallthru
        _
      %p701 = scmp.le.s32.totalorder 2, %s16
      // Predicated region
      $region90: #{tpu_custom_call.1} parent=5 // pred_check
        %p702 = pneg %p701
      $region91: #{tpu_custom_call.1} parent=5 // pred_check_branch
        %704 = sbr.rel (%p702) target = $region93
      $region92: #{tpu_custom_call.1} parent=5 // pred_region
        %s705 = ssub.s32 %s16, 2
        // Predicated region
        $region94: #{tpu_custom_call.1} parent=92 // pred_check
          %p706 = pneg %p156
        $region95: #{tpu_custom_call.1} parent=92 // pred_check_branch
          %708 = sbr.rel (%p706) target = $region97
        $region96: #{tpu_custom_call.1} parent=92 // pred_region
          %s709 = sand.u32 %s141, 1
          %s710 = scalar_lea.sflag [#allocation4], %s709
          %s711 = sand.u32 %s141, 1
          %s712 = smul.addr %s711, 8
          %s713 = scalar_lea.vmem [#allocation3], %s712
          %714 = dma.done %s710, 128
        $region97: #{tpu_custom_call.1} parent=92 // pred_fallthru
          _
        // Predicated region
        $region98: #{tpu_custom_call.1} parent=92 // pred_check
          %p715 = pneg %p188
        $region99: #{tpu_custom_call.1} parent=92 // pred_check_branch
          %717 = sbr.rel (%p715) target = $region101
        $region100: #{tpu_custom_call.1} parent=92 // pred_region
          %s718 = smul.u32 %s29, 2
          %s719 = sadd.s32 %s718, %s31
          %s720 = smul.u32 2, %s719
          %p721 = scmp.lt.s32.totalorder %s30, 3
          %s722 = scalar_select %p721, %s30, 3
          %p723 = scmp.lt.s32.totalorder %s720, 7
          %s724 = scalar_select %p723, %s720, 7
          %s725 = smul.addr %s722, 8
          %s726 = sadd.s32 %s724, %s725
          %s727 = smul.addr %s726, 8
          %s728 = scalar_lea.vmem %s4, %s727
        $region101: #{tpu_custom_call.1} parent=92 // pred_fallthru
          _
        // Predicated region
        $region102: #{tpu_custom_call.1} parent=92 // pred_check
          %p729 = pneg %p220
        $region103: #{tpu_custom_call.1} parent=92 // pred_check_branch
          %731 = sbr.rel (%p729) target = $region105
        $region104: #{tpu_custom_call.1} parent=92 // pred_region
          %s732 = smul.u32 %s29, 2
          %s733 = sadd.s32 %s732, %s31
          %s734 = smul.u32 2, %s733
          %p735 = scmp.lt.s32.totalorder %s30, 3
          %s736 = scalar_select %p735, %s30, 3
          %p737 = scmp.lt.s32.totalorder %s734, 7
          %s738 = scalar_select %p737, %s734, 7
          %s739 = smul.addr %s736, 8
          %s740 = sadd.s32 %s738, %s739
          %s741 = smul.addr %s740, 8
          %s742 = scalar_lea.vmem %s5, %s741
        $region105: #{tpu_custom_call.1} parent=92 // pred_fallthru
          _
        // Predicated region
        $region106: #{tpu_custom_call.1} parent=92 // pred_check
          %p743 = pneg %p252
        $region107: #{tpu_custom_call.1} parent=92 // pred_check_branch
          %745 = sbr.rel (%p743) target = $region109
        $region108: #{tpu_custom_call.1} parent=92 // pred_region
          %s746 = smul.u32 %s29, 2
          %s747 = sadd.s32 %s746, %s31
          %s748 = smul.u32 2, %s747
          %p749 = scmp.lt.s32.totalorder %s30, 3
          %s750 = scalar_select %p749, %s30, 3
          %p751 = scmp.lt.s32.totalorder %s748, 7
          %s752 = scalar_select %p751, %s748, 7
          %s753 = smul.addr %s750, 8
          %s754 = sadd.s32 %s752, %s753
          %s755 = smul.addr %s754, 8
          %s756 = scalar_lea.vmem %s6, %s755
        $region109: #{tpu_custom_call.1} parent=92 // pred_fallthru
          _
      $region93: #{tpu_custom_call.1} parent=5 // pred_fallthru
        _
    $region6: #{tpu_custom_call.1} parent=1 // loop_footer
      %s20 = sadd.s32 1, %s16
    $region7: #{tpu_custom_call.1} parent=1 // loop_footer_branch
      %15 = sbr.rel target = $region3
    $region8: #{tpu_custom_call.1} parent=1 // loop_exit
      _
    %757 = vsyncpa [#allocation4], 1
    %s758 = scalar_lea.sflag [#allocation4], 1
    %759 = vsyncpa %s758, 1

</llo_original>
